<compile_context>
chip_gen: v7x
topology: tpu7x:2x2x1
jax: 0.10.0
libtpu: 0.0.40
codegen_flags: <defaults>
</compile_context>

<pallas_src>
import math
import functools

import jax
import jax.numpy as jnp
from jax import lax
from jax.experimental import pallas as pl
from jax.experimental.pallas import tpu as pltpu


# Safe on every generation: well below v5e/v6e 128 MiB and v7x 64 MiB physical.
_VMEM_LIMIT_BYTES = 48 * 1024 * 1024


# ----------------------------------------------------------------------------
# Linear projection kernel
# ----------------------------------------------------------------------------
def _linear_kernel(x_ref, w_ref, b_ref, o_ref):
    """One (tm, d_in) x (d_in, d_out) tile of x @ w + b (bf16 MXU, f32 acc).

    Weights/bias arrive pre-cast to bf16 (no per-step cast); the activation
    cast is a no-op when x is already bf16 (attention context path).
    """
    x = x_ref[...].astype(jnp.bfloat16)
    acc = jnp.dot(x, w_ref[...], preferred_element_type=jnp.float32)
    o_ref[...] = (acc + b_ref[...]).astype(o_ref.dtype)


def linear_pallas(x2d, w, b, out_dtype=jnp.float32, tile_m=None):
    """Tiled x2d @ w + b.  x2d: [M, d_in], w: [d_in, d_out] bf16, b: [d_out] bf16."""
    M, d_in = x2d.shape
    d_out = w.shape[1]
    if tile_m is None:
        # Bigger M tiles amortize the ~0.35us per-grid-step overhead (measured
        # ~29% -> ~85% of HBM roofline going 128 -> 512) while keeping >= 2
        # grid steps for megacore sharding on v7x.
        tile_m = 256 if M >= 512 else 128
    tm = min(tile_m, M)
    grid_m = pl.cdiv(M, tm)

    cost = pl.CostEstimate(
        flops=2 * M * d_in * d_out,
        transcendentals=0,
        bytes_accessed=int(
            M * d_in * x2d.dtype.itemsize
            + (d_in * d_out + d_out) * w.dtype.itemsize
            + M * d_out * jnp.dtype(out_dtype).itemsize),
    )
    return pl.pallas_call(
        _linear_kernel,
        out_shape=jax.ShapeDtypeStruct((M, d_out), out_dtype),
        grid_spec=pltpu.PrefetchScalarGridSpec(
            num_scalar_prefetch=0,
            grid=(grid_m,),
            in_specs=[
                pl.BlockSpec((tm, d_in), lambda i: (i, 0)),
                pl.BlockSpec((d_in, d_out), lambda i: (0, 0)),
                pl.BlockSpec((1, d_out), lambda i: (0, 0)),
            ],
            out_specs=pl.BlockSpec((tm, d_out), lambda i: (i, 0)),
        ),
        compiler_params=pltpu.CompilerParams(
            dimension_semantics=("parallel",),
            vmem_limit_bytes=_VMEM_LIMIT_BYTES),
        cost_estimate=cost,
    )(x2d, w, b.reshape(1, d_out))


# ----------------------------------------------------------------------------
# Flash-style attention kernel (online softmax over KV tiles)
# ----------------------------------------------------------------------------
def _flash_attention_body(q_ref, k_ref, v_ref, mask_ref, o_ref,
                          m_sc, l_sc, acc_sc, *, h, d_k):
    """One (batch, q-tile, kv-tile) grid step, all heads.

    q_ref:  (1, tq, d_model) bf16 ref (q columns of the packed qkv, pre-scaled)
    k_ref:  (1, tk, d_model) bf16 ref
    v_ref:  (1, tk, d_model) bf16 ref
    mask_ref: (1, tq, tk) int8 ref or None
    o_ref:  (1, tq, d_model) bf16 output ref (written once, lane-dense)
    m_sc/l_sc: (h, tq, 1) f32 online-softmax statistics
    acc_sc: (tq, d_model) f32 context accumulator
    """
    ki = pl.program_id(2)

    @pl.when(ki == 0)
    def _():
        m_sc[...] = jnp.full_like(m_sc, -jnp.inf)
        l_sc[...] = jnp.zeros_like(l_sc)
        acc_sc[...] = jnp.zeros_like(acc_sc)

    # Mask bias computed ONCE per grid step and shared by every head
    # (hoisted out of the head loop; one compare+select instead of h).
    neg_bias = None
    if mask_ref is not None:
        neg_bias = jnp.where(mask_ref[0] == 0,
                             jnp.float32(-1e9), jnp.float32(0.0))

    # Static unroll over heads (small h); operands sliced from the Refs so only
    # one head's tiles are live at a time.  For large h, a fori_loop with
    # pl.ds offsets would bound live ranges further.
    for hh in range(h):
        q = q_ref[0, :, hh * d_k:(hh + 1) * d_k]          # (tq, d_k) bf16
        k = k_ref[0, :, hh * d_k:(hh + 1) * d_k]          # (tk, d_k) bf16
        v = v_ref[0, :, hh * d_k:(hh + 1) * d_k]          # (tk, d_k) bf16

        # q @ k^T without materializing k.T: contract the last dims directly.
        s = lax.dot_general(q, k, (((1,), (1,)), ((), ())),
                            preferred_element_type=jnp.float32)   # (tq, tk)
        if neg_bias is not None:
            s = s + neg_bias

        # Online softmax, statistics in f32.
        m_prev = m_sc[hh]                                  # (tq, 1)
        m_new = jnp.maximum(m_prev, jnp.max(s, axis=-1, keepdims=True))
        alpha = jnp.exp(m_prev - m_new)
        p = jnp.exp(s - m_new)
        l_sc[hh] = alpha * l_sc[hh] + jnp.sum(p, axis=-1, keepdims=True)

        ctx = jnp.dot(p.astype(jnp.bfloat16), v,
                      preferred_element_type=jnp.float32)          # (tq, d_k)
        col = slice(hh * d_k, (hh + 1) * d_k)
        acc_sc[:, col] = alpha * acc_sc[:, col] + ctx
        m_sc[hh] = m_new

    @pl.when(ki == pl.num_programs(2) - 1)
    def _():
        # Normalize and emit ONE lane-dense (tq, d_model) store per block.
        tq = acc_sc.shape[0]
        inv = [jnp.broadcast_to(pl.reciprocal(l_sc[hh], approx=True), (tq, d_k))
               for hh in range(h)]
        inv_full = jnp.concatenate(inv, axis=-1)            # (tq, d_model)
        o_ref[0] = (acc_sc[...] * inv_full).astype(o_ref.dtype)


def _flash_kernel(q_ref, k_ref, v_ref, o_ref, m_sc, l_sc, acc_sc, *, h, d_k):
    _flash_attention_body(q_ref, k_ref, v_ref, None, o_ref,
                          m_sc, l_sc, acc_sc, h=h, d_k=d_k)


def _flash_kernel_masked(q_ref, k_ref, v_ref, mask_ref, o_ref,
                         m_sc, l_sc, acc_sc, *, h, d_k):
    _flash_attention_body(q_ref, k_ref, v_ref, mask_ref, o_ref,
                          m_sc, l_sc, acc_sc, h=h, d_k=d_k)


def attention_pallas(qkv, h, mask=None, *, tile_q=128, tile_k=128):
    """qkv: [B, S, 3*d_model] bf16 packed projections -> ctx [B, S, d_model] bf16.

    mask: optional [B, S, S] or [1, S, S] (batch-invariant); nonzero = keep.
    """
    B, S, three_d = qkv.shape
    d_model = three_d // 3
    d_k = d_model // h
    assert d_model % 128 == 0, "d_model must be a multiple of 128 (lane width)"

    tq, tk = min(tile_q, S), min(tile_k, S)
    assert S % tq == 0 and S % tk == 0, (S, tq, tk)
    nq, nk = S // tq, S // tk

    # q / k / v are addressed as column blocks (block index 0/1/2 on the packed
    # last axis); the q block index is constant in ki so it stays VMEM-resident
    # across the whole KV sweep.
    in_specs = [
        pl.BlockSpec((1, tq, d_model), lambda b, qi, ki: (b, qi, 0)),
        pl.BlockSpec((1, tk, d_model), lambda b, qi, ki: (b, ki, 1)),
        pl.BlockSpec((1, tk, d_model), lambda b, qi, ki: (b, ki, 2)),
    ]
    args = [qkv, qkv, qkv]

    if mask is not None:
        mask_i8 = (mask != 0).astype(jnp.int8)              # 4x less HBM traffic
        if mask_i8.shape[0] == 1:                           # batch-invariant mask
            in_specs.append(pl.BlockSpec((1, tq, tk), lambda b, qi, ki: (0, qi, ki)))
        else:
            in_specs.append(pl.BlockSpec((1, tq, tk), lambda b, qi, ki: (b, qi, ki)))
        args.append(mask_i8)
        kernel = functools.partial(_flash_kernel_masked, h=h, d_k=d_k)
        mask_bytes = int(mask_i8.size) * nq // mask_i8.shape[0] * mask_i8.shape[0]
    else:
        kernel = functools.partial(_flash_kernel, h=h, d_k=d_k)
        mask_bytes = 0

    cost = pl.CostEstimate(
        flops=4 * B * h * S * S * d_k,
        transcendentals=B * h * S * S,
        bytes_accessed=int(
            B * S * d_model * 2                 # q read once per q-tile
            + 2 * B * S * d_model * 2 * nq      # k, v re-read per q-tile
            + B * S * d_model * 2               # output
            + mask_bytes),
    )

    return pl.pallas_call(
        kernel,
        out_shape=jax.ShapeDtypeStruct((B, S, d_model), jnp.bfloat16),
        grid_spec=pltpu.PrefetchScalarGridSpec(
            num_scalar_prefetch=0,
            grid=(B, nq, nk),
            in_specs=in_specs,
            out_specs=pl.BlockSpec((1, tq, d_model), lambda b, qi, ki: (b, qi, 0)),
            scratch_shapes=[
                pltpu.VMEM((h, tq, 1), jnp.float32),   # running max
                pltpu.VMEM((h, tq, 1), jnp.float32),   # running denom
                pltpu.VMEM((tq, d_model), jnp.float32),  # context accumulator
            ],
        ),
        compiler_params=pltpu.CompilerParams(
            dimension_semantics=("parallel", "parallel", "arbitrary"),
            vmem_limit_bytes=_VMEM_LIMIT_BYTES),
        cost_estimate=cost,
    )(*args)


# ----------------------------------------------------------------------------
# Parameter prep + full forward
# ----------------------------------------------------------------------------
def prepare_params(params, h, d_model):
    """One-time prep: fuse wq|wk|wv, fold 1/sqrt(d_k) into q, pre-cast to bf16."""
    scale = 1.0 / math.sqrt(d_model // h)
    w_qkv = jnp.concatenate([params["wq"] * scale, params["wk"], params["wv"]],
                            axis=1)
    b_qkv = jnp.concatenate([params["bq"] * scale, params["bk"], params["bv"]])
    # bf16 cast here (not per grid step): halves weight DMA bytes & VMEM.
    return {
        "w_qkv": w_qkv.astype(jnp.bfloat16),
        "b_qkv": b_qkv.astype(jnp.bfloat16),
        "wo": params["wo"].astype(jnp.bfloat16),
        "bo": params["bo"].astype(jnp.bfloat16),
    }


def multi_headed_attention(query, key, value, prepped, h, mask=None,
                           self_attention=None):
    """Forward pass. query/key/value: [B, S, d_model] f32; mask: [B|1, S, S] or None.

    self_attention=True forces the fused-QKV fast path (recommended under jit,
    where the `query is key is value` identity check may not hold for tracers).
    """
    B, S, d_model = query.shape
    if self_attention is None:
        self_attention = (query is key) and (key is value)

    if self_attention:
        # BERT usage: one fused QKV projection, x read from HBM once.
        qkv2d = linear_pallas(query.reshape(B * S, d_model),
                              prepped["w_qkv"], prepped["b_qkv"],
                              out_dtype=jnp.bfloat16)
    else:
        # Cross-attention fallback: separate projections, then pack.
        w, b = prepped["w_qkv"], prepped["b_qkv"]
        q2d = linear_pallas(query.reshape(B * S, d_model),
                            w[:, :d_model], b[:d_model], jnp.bfloat16)
        k2d = linear_pallas(key.reshape(B * S, d_model),
                            w[:, d_model:2 * d_model], b[d_model:2 * d_model],
                            jnp.bfloat16)
        v2d = linear_pallas(value.reshape(B * S, d_model),
                            w[:, 2 * d_model:], b[2 * d_model:], jnp.bfloat16)
        qkv2d = jnp.concatenate([q2d, k2d, v2d], axis=-1)

    qkv = qkv2d.reshape(B, S, 3 * d_model)
    ctx = attention_pallas(qkv, h, mask=mask)               # [B, S, d_model] bf16
    out = linear_pallas(ctx.reshape(B * S, d_model), prepped["wo"],
                        prepped["bo"], out_dtype=jnp.float32)
    return out.reshape(B, S, d_model)


# ----------------------------------------------------------------------------
# Pure-JAX f32 reference (PyTorch semantics)
# ----------------------------------------------------------------------------
def reference(query, key, value, params, h, mask=None):
    B, S, d_model = query.shape
    d_k = d_model // h
    q = query @ params["wq"] + params["bq"]
    k = key @ params["wk"] + params["bk"]
    v = value @ params["wv"] + params["bv"]
    sh = lambda t: t.reshape(B, S, h, d_k).transpose(0, 2, 1, 3)
    qh, kh, vh = sh(q), sh(k), sh(v)
    scores = jnp.einsum("bhqd,bhkd->bhqk", qh, kh) / math.sqrt(d_k)
    if mask is not None:
        scores = jnp.where(mask[:, None, :, :] == 0, -1e9, scores)
    p = jax.nn.softmax(scores, axis=-1)
    ctx = jnp.einsum("bhqk,bhkd->bhqd", p, vh)
    ctx = ctx.transpose(0, 2, 1, 3).reshape(B, S, d_model)
    return ctx @ params["wo"] + params["bo"]


# ----------------------------------------------------------------------------
# Main
# ----------------------------------------------------------------------------
if __name__ == "__main__":
    # Small, TPU-tile-aligned BERT-style shapes (M = B*S = 256 -> 2 M-tiles).
    B, S, d_model, h = 2, 128, 128, 4

    keys = jax.random.split(jax.random.PRNGKey(0), 12)
    wscale = 1.0 / math.sqrt(d_model)
    # Weights stored as [d_in, d_out] (already transposed vs nn.Linear.weight).
    params = {
        "wq": jax.random.normal(keys[0], (d_model, d_model), jnp.float32) * wscale,
        "bq": jax.random.normal(keys[1], (d_model,), jnp.float32) * 0.01,
        "wk": jax.random.normal(keys[2], (d_model, d_model), jnp.float32) * wscale,
        "bk": jax.random.normal(keys[3], (d_model,), jnp.float32) * 0.01,
        "wv": jax.random.normal(keys[4], (d_model, d_model), jnp.float32) * wscale,
        "bv": jax.random.normal(keys[5], (d_model,), jnp.float32) * 0.01,
        "wo": jax.random.normal(keys[6], (d_model, d_model), jnp.float32) * wscale,
        "bo": jax.random.normal(keys[7], (d_model,), jnp.float32) * 0.01,
    }
    x = jax.random.normal(keys[8], (B, S, d_model), jnp.float32)

    prepped = prepare_params(params, h, d_model)

    # Unmasked self-attention (query == key == value, as in BERT).
    out = jax.block_until_ready(
        multi_headed_attention(x, x, x, prepped, h, self_attention=True))
    ref = reference(x, x, x, params, h)
    assert out.shape == (B, S, d_model), out.shape
    # bf16 MXU operands / bf16 weights (f32 accumulation) -> bf16-level tolerance.
    assert jnp.allclose(out, ref, atol=5e-2, rtol=5e-2), (
        float(jnp.max(jnp.abs(out - ref))))

    # Masked path, reproducing scores.masked_fill(mask == 0, -1e9).
    # Batch-invariant causal mask passed as (1, S, S) int -> VMEM-friendly int8.
    mask = jnp.tril(jnp.ones((S, S), jnp.int32))[None, :, :]
    out_m = jax.block_until_ready(
        multi_headed_attention(x, x, x, prepped, h, mask=mask,
                               self_attention=True))
    ref_m = reference(x, x, x, params, h, mask=mask)
    assert jnp.allclose(out_m, ref_m, atol=5e-2, rtol=5e-2), (
        float(jnp.max(jnp.abs(out_m - ref_m))))

    print("KERNEL_OK")
</pallas_src>

<mosaic_0001>
module attributes {stable_mosaic.version = 11 : i64} {
  func.func @_linear_kernel(%arg0: i32, %arg1: memref<128x128xf32, #tpu.memory_space<vmem>>, %arg2: memref<128x384xbf16, #tpu.memory_space<vmem>>, %arg3: memref<1x384xbf16, #tpu.memory_space<vmem>>, %arg4: memref<128x384xbf16, #tpu.memory_space<vmem>>) attributes {dimension_semantics = [#tpu.dimension_semantics<parallel>], iteration_bounds = array<i64: 2>, scalar_prefetch = 0 : i64, scratch_operands = 0 : i64, tpu.core_type = #tpu.core_type<tc>, window_params = [{transform_indices = @transform_0, window_bounds = array<i64: 128, 128>}, {pipeline_mode = #tpu.pipeline_mode<synchronous>, transform_indices = @transform_1, window_bounds = array<i64: 128, 384>}, {pipeline_mode = #tpu.pipeline_mode<synchronous>, transform_indices = @transform_2, window_bounds = array<i64: 1, 384>}, {transform_indices = @transform_3, window_bounds = array<i64: 128, 384>}]} {
    %c0 = arith.constant 0 : index
    %c0_0 = arith.constant 0 : index
    %0 = vector.load %arg1[%c0, %c0_0] : memref<128x128xf32, #tpu.memory_space<vmem>>, vector<128x128xf32>
    %1 = arith.truncf %0 : vector<128x128xf32> to vector<128x128xbf16>
    %c0_1 = arith.constant 0 : index
    %c0_2 = arith.constant 0 : index
    %2 = vector.load %arg2[%c0_1, %c0_2] : memref<128x384xbf16, #tpu.memory_space<vmem>>, vector<128x384xbf16>
    %cst = arith.constant dense<0.000000e+00> : vector<128x384xf32>
    %3 = tpu.matmul %1, %2, %cst {dimension_numbers = #tpu.dot_dimension_numbers<[1], [0], [0], [1], [0, 0, 1, 1], [], []>} : vector<128x128xbf16>, vector<128x384xbf16>, vector<128x384xf32> -> vector<128x384xf32>
    %c0_3 = arith.constant 0 : index
    %c0_4 = arith.constant 0 : index
    %4 = vector.load %arg3[%c0_3, %c0_4] : memref<1x384xbf16, #tpu.memory_space<vmem>>, vector<1x384xbf16>
    %5 = arith.extf %4 : vector<1x384xbf16> to vector<1x384xf32>
    %6 = vector.broadcast %5 : vector<1x384xf32> to vector<128x384xf32>
    %7 = arith.addf %3, %6 : vector<128x384xf32>
    %8 = arith.truncf %7 : vector<128x384xf32> to vector<128x384xbf16>
    %c0_5 = arith.constant 0 : index
    %c0_6 = arith.constant 0 : index
    %9 = vector.load %arg4[%c0_5, %c0_6] : memref<128x384xbf16, #tpu.memory_space<vmem>>, vector<128x384xbf16>
    tpu.vector_store %arg4[%c0_5, %c0_6], %8 {strides = array<i32>} : memref<128x384xbf16, #tpu.memory_space<vmem>>, vector<128x384xbf16>,
    return
  }
  func.func @transform_0(%arg0: i32) -> (i32, i32) {
    %c0_i32 = arith.constant 0 : i32
    %c0_i32_0 = arith.constant 0 : i32
    return %arg0, %c0_i32 : i32, i32
  }
  func.func @transform_1(%arg0: i32) -> (i32, i32) {
    %c0_i32 = arith.constant 0 : i32
    %c0_i32_0 = arith.constant 0 : i32
    %c0_i32_1 = arith.constant 0 : i32
    return %c0_i32, %c0_i32_0 : i32, i32
  }
  func.func @transform_2(%arg0: i32) -> (i32, i32) {
    %c0_i32 = arith.constant 0 : i32
    %c0_i32_0 = arith.constant 0 : i32
    %c0_i32_1 = arith.constant 0 : i32
    return %c0_i32, %c0_i32_0 : i32, i32
  }
  func.func @transform_3(%arg0: i32) -> (i32, i32) {
    %c0_i32 = arith.constant 0 : i32
    %c0_i32_0 = arith.constant 0 : i32
    return %arg0, %c0_i32 : i32, i32
  }
}

</mosaic_0001>

<llo_original>
// kernel: tpu_custom_call.1
$region0: #{tpu_custom_call.1}
  #allocation0 [shape = 'u32[]', space=smem, size = 0x4, offset = 0x4, fixed_abs, tag = 'smem constant byte address 0x4 - core index']
  #allocation1 [shape = 'u32[144,128]{1,0:T(1,128)}', space=vmem, size = 0x12000, scoped, tag = 'internal scratch']
  %s0 = inlined_call_operand.hbm [shape: f32[256,128], index: 0, kind: input, shape index: {}]
  %s1 = inlined_call_operand.hbm [shape: bf16[128,384], index: 1, kind: input, shape index: {}]
  %s2 = inlined_call_operand.vmem [shape: bf16[1,384], index: 2, kind: input, shape index: {}]
  %s3 = inlined_call_operand.hbm [shape: bf16[256,384], index: 3, kind: output, shape index: {}]
  %s4 = sld [smem:[#allocation0]]
  $region53: #{tpu_custom_call.1} parent=0
    _
  %s6 = ssub.s32 1, %s4
  %s7 = scalar_select 0, %s6, %s4
  $region1: #{tpu_custom_call.1} parent=0
    #allocation2 [shape = 'u8[131072]{0}', space=vmem, size = 0x20000, scoped, tag = 'input window, operand 0']
    #allocation3 [shape = 's32[2]{0}', space=sflag, size = 0x8, scoped, tag = 'scoped memory for tpu_custom_call.1']
    #allocation4 [shape = 's32[2]{0}', space=sflag, size = 0x8, scoped, tag = 'scoped memory for tpu_custom_call.1']
    #allocation5 [shape = 'u8[98304]{0}', space=vmem, size = 0x18000, scoped, tag = 'input window, operand 1, single buffered']
    #allocation6 [shape = 's32[1]{0}', space=sflag, size = 0x4, scoped, tag = 'scoped memory for tpu_custom_call.1']
    #allocation7 [shape = 'u8[196608]{0}', space=vmem, size = 0x30000, scoped, tag = 'output window, operand 0']
    %8 = vsyncpa [#allocation3], 0
    %s9 = scalar_lea.sflag [#allocation3], 1
    %10 = vsyncpa %s9, 0
    %11 = vsyncpa [#allocation6], 0
    %12 = vsyncpa [#allocation4], 0
    %s13 = scalar_lea.sflag [#allocation4], 1
    %14 = vsyncpa %s13, 0
    loop: start=0, step=1, limit=4
    $region2: #{tpu_custom_call.1} parent=1 // loop_pre_header
      _
    $region3: #{tpu_custom_call.1} parent=1 // loop_header
      %s16 = sphi 0, %s20
      %p17 = scmp.ge.s32.totalorder %s16, 4
      %s26 = sphi 0, %s28
      %s29 = sphi 0, %s26
      %s30 = sphi 0, %s29
      %s46 = sphi 0, %s30
      %s50 = sphi 0, %s50
      %s52 = sphi 0, %s50
      %s53 = sphi 0, %s52
      %s67 = sphi 0, %s53
      %s71 = sphi 0, %s71
      %s73 = sphi 0, %s71
      %s74 = sphi 0, %s73
      %s88 = sphi 0, %s74
      %s94 = sphi 0, %s96
      %s97 = sphi 0, %s94
      %s98 = sphi 0, %s97
      %s114 = sphi 0, %s98
    $region4: #{tpu_custom_call.1} parent=1 // loop_header_branch
      %19 = sbr.rel (%p17) target = $region8
    $region5: #{tpu_custom_call.1} parent=1 // loop_body
      %s21 = ssub.s32 %s16, 1
      %s22 = ssub.s32 %s16, 2
      %s23 = sadd.s32 %s16, 1
      %s24 = ssub.s32 %s16, %s23
      %p25 = scmp.eq.s32.totalorder %s24, 0
      %s27 = sadd.s32 %s26, 1
      %s28 = scalar_select %p25, %s26, %s27
      %p31 = pneg %p25
      %p32 = scmp.eq.s32.totalorder %s16, 1
      %p33 = por %p31, %p32
      %p34 = scmp.ne.s32.totalorder %s26, %s29
      %p35 = scmp.eq.s32.totalorder %s16, 0
      %p36 = por %p34, %p35
      %p37 = scmp.ne.s32.totalorder %s26, %s29
      %p38 = scmp.eq.s32.totalorder %s21, 1
      %p39 = por %p37, %p38
      %p40 = scmp.ne.s32.totalorder %s29, %s30
      %p41 = scmp.eq.s32.totalorder %s21, 0
      %p42 = por %p40, %p41
      %p43 = scmp.ne.s32.totalorder %s29, %s30
      %p44 = scmp.eq.s32.totalorder %s22, 1
      %p45 = por %p43, %p44
      %p47 = scmp.ne.s32.totalorder %s30, %s46
      %p48 = scmp.eq.s32.totalorder %s22, 0
      %p49 = por %p47, %p48
      %s51 = sadd.s32 %s50, 1
      %p54 = scmp.eq.s32.totalorder %s16, 1
      %p55 = scmp.ne.s32.totalorder %s50, %s52
      %p56 = scmp.eq.s32.totalorder %s16, 0
      %p57 = por %p55, %p56
      %p58 = scmp.ne.s32.totalorder %s50, %s52
      %p59 = scmp.eq.s32.totalorder %s21, 1
      %p60 = por %p58, %p59
      %p61 = scmp.ne.s32.totalorder %s52, %s53
      %p62 = scmp.eq.s32.totalorder %s21, 0
      %p63 = por %p61, %p62
      %p64 = scmp.ne.s32.totalorder %s52, %s53
      %p65 = scmp.eq.s32.totalorder %s22, 1
      %p66 = por %p64, %p65
      %p68 = scmp.ne.s32.totalorder %s53, %s67
      %p69 = scmp.eq.s32.totalorder %s22, 0
      %p70 = por %p68, %p69
      %s72 = sadd.s32 %s71, 1
      %p75 = scmp.eq.s32.totalorder %s16, 1
      %p76 = scmp.ne.s32.totalorder %s71, %s73
      %p77 = scmp.eq.s32.totalorder %s16, 0
      %p78 = por %p76, %p77
      %p79 = scmp.ne.s32.totalorder %s71, %s73
      %p80 = scmp.eq.s32.totalorder %s21, 1
      %p81 = por %p79, %p80
      %p82 = scmp.ne.s32.totalorder %s73, %s74
      %p83 = scmp.eq.s32.totalorder %s21, 0
      %p84 = por %p82, %p83
      %p85 = scmp.ne.s32.totalorder %s73, %s74
      %p86 = scmp.eq.s32.totalorder %s22, 1
      %p87 = por %p85, %p86
      %p89 = scmp.ne.s32.totalorder %s74, %s88
      %p90 = scmp.eq.s32.totalorder %s22, 0
      %p91 = por %p89, %p90
      %s92 = ssub.s32 %s16, %s23
      %p93 = scmp.eq.s32.totalorder %s92, 0
      %s95 = sadd.s32 %s94, 1
      %s96 = scalar_select %p93, %s94, %s95
      %p99 = pneg %p93
      %p100 = scmp.eq.s32.totalorder %s16, 1
      %p101 = por %p99, %p100
      %p102 = scmp.ne.s32.totalorder %s94, %s97
      %p103 = scmp.eq.s32.totalorder %s16, 0
      %p104 = por %p102, %p103
      %p105 = scmp.ne.s32.totalorder %s94, %s97
      %p106 = scmp.eq.s32.totalorder %s21, 1
      %p107 = por %p105, %p106
      %p108 = scmp.ne.s32.totalorder %s97, %s98
      %p109 = scmp.eq.s32.totalorder %s21, 0
      %p110 = por %p108, %p109
      %p111 = scmp.ne.s32.totalorder %s97, %s98
      %p112 = scmp.eq.s32.totalorder %s22, 1
      %p113 = por %p111, %p112
      %p115 = scmp.ne.s32.totalorder %s98, %s114
      %p116 = scmp.eq.s32.totalorder %s22, 0
      %p117 = por %p115, %p116
      %p118 = scmp.le.s32.totalorder 1, %s16
      %p119 = scmp.lt.s32.totalorder %s16, 3
      %p120 = pnand %p118, %p119
      %p121 = pneg %p120
      // Predicated region
      $region9: #{tpu_custom_call.1} parent=5 // pred_check
        _
      $region10: #{tpu_custom_call.1} parent=5 // pred_check_branch
        %123 = sbr.rel (%p120) target = $region12
      $region11: #{tpu_custom_call.1} parent=5 // pred_region
        %s124 = ssub.s32 %s16, 1
        // Predicated region
        $region13: #{tpu_custom_call.1} parent=11 // pred_check
          %p125 = pneg %p63
        $region14: #{tpu_custom_call.1} parent=11 // pred_check_branch
          %127 = sbr.rel (%p125) target = $region16
        $region15: #{tpu_custom_call.1} parent=11 // pred_region
          %s129 = ssub.s32 3072, 3072
          %130 = vsyncadd [#allocation6], %s129
          %s131 = sshll.u32 [#allocation5], 4
          %s132 = int_to_ptr.vmem [resolvable:$true] %s131
          %137 = dma.hbm_to_vmem [thread:$0]  %s1, 3072, %s132, [#allocation6], 192, 192, 12
        $region16: #{tpu_custom_call.1} parent=11 // pred_fallthru
          _
        // Predicated region
        $region17: #{tpu_custom_call.1} parent=11 // pred_check
          %p138 = pneg %p84
        $region18: #{tpu_custom_call.1} parent=11 // pred_check_branch
          %140 = sbr.rel (%p138) target = $region20
        $region19: #{tpu_custom_call.1} parent=11 // pred_region
          _
        $region20: #{tpu_custom_call.1} parent=11 // pred_fallthru
          _
      $region12: #{tpu_custom_call.1} parent=5 // pred_fallthru
        _
      %p141 = scmp.lt.s32.totalorder %s16, 2
      // Predicated region
      $region21: #{tpu_custom_call.1} parent=5 // pred_check
        %p142 = pneg %p141
      $region22: #{tpu_custom_call.1} parent=5 // pred_check_branch
        %144 = sbr.rel (%p142) target = $region24
      $region23: #{tpu_custom_call.1} parent=5 // pred_region
        // Predicated region
        $region25: #{tpu_custom_call.1} parent=23 // pred_check
          %p145 = pneg %p36
        $region26: #{tpu_custom_call.1} parent=23 // pred_check_branch
          %147 = sbr.rel (%p145) target = $region28
        $region27: #{tpu_custom_call.1} parent=23 // pred_region
          %s148 = sand.u32 %s26, 1
          %s149 = scalar_lea.sflag [#allocation3], %s148
          %s150 = sand.u32 %s26, 1
          %s151 = smul.addr %s150, 128
          %s152 = scalar_lea.vmem [#allocation2], %s151
          %s153 = smul.u32 16, %s16
          %s155 = ssub.s32 2048, 2048
          %156 = vsyncadd %s149, %s155
          %s157 = smul.addr %s153, 128
          %s158 = scalar_lea.hbm %s0, %s157
          %s159 = sshll.u32 %s152, 4
          %s160 = int_to_ptr.vmem [resolvable:$true] %s159
          %165 = dma.hbm_to_vmem [thread:$0]  %s158, 2048, %s160, %s149, 128, 128, 8
        $region28: #{tpu_custom_call.1} parent=23 // pred_fallthru
          _
      $region24: #{tpu_custom_call.1} parent=5 // pred_fallthru
        _
      %p166 = scmp.le.s32.totalorder 1, %s16
      %p167 = scmp.lt.s32.totalorder %s16, 3
      %p168 = pnand %p166, %p167
      %p169 = pneg %p168
      // Predicated region
      $region29: #{tpu_custom_call.1} parent=5 // pred_check
        _
      $region30: #{tpu_custom_call.1} parent=5 // pred_check_branch
        %171 = sbr.rel (%p168) target = $region32
      $region31: #{tpu_custom_call.1} parent=5 // pred_region
        %s172 = ssub.s32 %s16, 1
        %s173 = sand.u32 %s29, 1
        %s174 = scalar_lea.sflag [#allocation3], %s173
        %s175 = sand.u32 %s29, 1
        %s176 = smul.addr %s175, 128
        %s177 = scalar_lea.vmem [#allocation2], %s176
        // Predicated region
        $region33: #{tpu_custom_call.1} parent=31 // pred_check
          %p178 = pneg %p42
        $region34: #{tpu_custom_call.1} parent=31 // pred_check_branch
          %180 = sbr.rel (%p178) target = $region36
        $region35: #{tpu_custom_call.1} parent=31 // pred_region
          %181 = dma.done %s174, 2048
        $region36: #{tpu_custom_call.1} parent=31 // pred_fallthru
          _
        // Predicated region
        $region37: #{tpu_custom_call.1} parent=31 // pred_check
          %p182 = pneg %p63
        $region38: #{tpu_custom_call.1} parent=31 // pred_check_branch
          %184 = sbr.rel (%p182) target = $region40
        $region39: #{tpu_custom_call.1} parent=31 // pred_region
          %185 = dma.done [#allocation6], 3072
        $region40: #{tpu_custom_call.1} parent=31 // pred_fallthru
          _
        %s186 = sand.u32 %s29, 1
        %s187 = scalar_lea.sflag [#allocation3], %s186
        %s188 = sand.u32 %s29, 1
        %s189 = smul.addr %s188, 128
        %s190 = scalar_lea.vmem [#allocation2], %s189
        %p191 = pneg %p42
        %p192 = pneg %p39
        %p193 = pneg %p63
        %p194 = pneg %p60
        %p195 = pneg %p84
        %p196 = pneg %p81
        %p197 = pneg %p110
        %p198 = pneg %p107
        %s199 = sand.u32 %s97, 1
        %s200 = scalar_lea.sflag [#allocation4], %s199
        %s201 = sand.u32 %s97, 1
        %s202 = smul.addr %s201, 192
        %s203 = scalar_lea.vmem [#allocation7], %s202
        %s204 = smul.u32 16, %s21
        %s205 = smul.u32 16, %s21
        %v207 = vld [vmem:[%s177] sm:$0xff]
        %v208 = vld [vmem:[%s177 + $0x8] sm:$0xff]
        %v209 = vld [vmem:[%s177 + $0x10] sm:$0xff]
        %v210 = vld [vmem:[%s177 + $0x18] sm:$0xff]
        %v211 = vld [vmem:[%s177 + $0x20] sm:$0xff]
        %v212 = vld [vmem:[%s177 + $0x28] sm:$0xff]
        %v213 = vld [vmem:[%s177 + $0x30] sm:$0xff]
        %v214 = vld [vmem:[%s177 + $0x38] sm:$0xff]
        %v215 = vld [vmem:[%s177 + $0x40] sm:$0xff]
        %v216 = vld [vmem:[%s177 + $0x48] sm:$0xff]
        %v217 = vld [vmem:[%s177 + $0x50] sm:$0xff]
        %v218 = vld [vmem:[%s177 + $0x58] sm:$0xff]
        %v219 = vld [vmem:[%s177 + $0x60] sm:$0xff]
        %v220 = vld [vmem:[%s177 + $0x68] sm:$0xff]
        %v221 = vld [vmem:[%s177 + $0x70] sm:$0xff]
        %v222 = vld [vmem:[%s177 + $0x78] sm:$0xff]
        %v223 = vpack.c.bf16 %v208, %v207
        %v224 = vpack.c.bf16 %v210, %v209
        %v225 = vpack.c.bf16 %v212, %v211
        %v226 = vpack.c.bf16 %v214, %v213
        %v227 = vpack.c.bf16 %v216, %v215
        %v228 = vpack.c.bf16 %v218, %v217
        %v229 = vpack.c.bf16 %v220, %v219
        %v230 = vpack.c.bf16 %v222, %v221
        %v231 = vld [vmem:[#allocation5] sm:$0xff]
        %v232 = vld [vmem:[#allocation5 + $0x8] sm:$0xf]
        %v233 = vld [vmem:[#allocation5 + $0xc] sm:$0xff]
        %v234 = vld [vmem:[#allocation5 + $0x14] sm:$0xf]
        %v235 = vld [vmem:[#allocation5 + $0x18] sm:$0xff]
        %v236 = vld [vmem:[#allocation5 + $0x20] sm:$0xf]
        %v237 = vld [vmem:[#allocation5 + $0x24] sm:$0xff]
        %v238 = vld [vmem:[#allocation5 + $0x2c] sm:$0xf]
        %v239 = vld [vmem:[#allocation5 + $0x30] sm:$0xff]
        %v240 = vld [vmem:[#allocation5 + $0x38] sm:$0xf]
        %v241 = vld [vmem:[#allocation5 + $0x3c] sm:$0xff]
        %v242 = vld [vmem:[#allocation5 + $0x44] sm:$0xf]
        %v243 = vld [vmem:[#allocation5 + $0x48] sm:$0xff]
        %v244 = vld [vmem:[#allocation5 + $0x50] sm:$0xf]
        %v245 = vld [vmem:[#allocation5 + $0x54] sm:$0xff]
        %v246 = vld [vmem:[#allocation5 + $0x5c] sm:$0xf]
        %v247 = vld [vmem:[#allocation5 + $0x60] sm:$0xff]
        %v248 = vld [vmem:[#allocation5 + $0x68] sm:$0xf]
        %v249 = vld [vmem:[#allocation5 + $0x6c] sm:$0xff]
        %v250 = vld [vmem:[#allocation5 + $0x74] sm:$0xf]
        %v251 = vld [vmem:[#allocation5 + $0x78] sm:$0xff]
        %v252 = vld [vmem:[#allocation5 + $0x80] sm:$0xf]
        %v253 = vld [vmem:[#allocation5 + $0x84] sm:$0xff]
        %v254 = vld [vmem:[#allocation5 + $0x8c] sm:$0xf]
        %v255 = vld [vmem:[#allocation5 + $0x90] sm:$0xff]
        %v256 = vld [vmem:[#allocation5 + $0x98] sm:$0xf]
        %v257 = vld [vmem:[#allocation5 + $0x9c] sm:$0xff]
        %v258 = vld [vmem:[#allocation5 + $0xa4] sm:$0xf]
        %v259 = vld [vmem:[#allocation5 + $0xa8] sm:$0xff]
        %v260 = vld [vmem:[#allocation5 + $0xb0] sm:$0xf]
        %v261 = vld [vmem:[#allocation5 + $0xb4] sm:$0xff]
        %v262 = vld [vmem:[#allocation5 + $0xbc] sm:$0xf]
        %v263 = vld [vmem:[%s2] sm:$0x7]
        %v264 = vunpack.c.l.bf16 %v263
        %v266 = vlaneseq
        %v267 = vshrl.u32 %v266, 7
        %v268 = vsub.s32 0, %v267
        %v269 = vrot.slane %v264, %v268
        %v270 = vlaneseq
        %v271 = vshrl.u32 %v270, 7
        %v272 = vsub.s32 2, %v271
        %v273 = vrot.slane %v264, %v272
        %v274 = vlaneseq
        %v275 = vshrl.u32 %v274, 7
        %v276 = vsub.s32 4, %v275
        %v277 = vrot.slane %v264, %v276
        %v281 = vlaneseq
        %v282 = vshrl.u32 %v281, 7
        %v283 = vsub.s32 0, %v282
        %v284 = vrot.slane %v269, %v283
        %v285 = vlaneseq
        %v286 = vshrl.u32 %v285, 7
        %v287 = vsub.s32 0, %v286
        %v288 = vrot.slane %v273, %v287
        %v289 = vlaneseq
        %v290 = vshrl.u32 %v289, 7
        %v291 = vsub.s32 0, %v290
        %v292 = vrot.slane %v277, %v291
        %v325 = vunpack.c.l.b16 %v231
        %v326 = vunpack.c.h.b16 %v231
        %v327 = vunpack.c.l.b16 %v232
        %v328 = vunpack.c.l.b16 %v233
        %v329 = vunpack.c.h.b16 %v233
        %v330 = vunpack.c.l.b16 %v234
        %v331 = vunpack.c.l.b16 %v235
        %v332 = vunpack.c.h.b16 %v235
        %v333 = vunpack.c.l.b16 %v236
        %v334 = vunpack.c.l.b16 %v237
        %v335 = vunpack.c.h.b16 %v237
        %v336 = vunpack.c.l.b16 %v238
        %v337 = vunpack.c.l.b16 %v239
        %v338 = vunpack.c.h.b16 %v239
        %v339 = vunpack.c.l.b16 %v240
        %v340 = vunpack.c.l.b16 %v241
        %v341 = vunpack.c.h.b16 %v241
        %v342 = vunpack.c.l.b16 %v242
        %v343 = vunpack.c.l.b16 %v243
        %v344 = vunpack.c.h.b16 %v243
        %v345 = vunpack.c.l.b16 %v244
        %v346 = vunpack.c.l.b16 %v245
        %v347 = vunpack.c.h.b16 %v245
        %v348 = vunpack.c.l.b16 %v246
        %v349 = vunpack.c.l.b16 %v247
        %v350 = vunpack.c.h.b16 %v247
        %v351 = vunpack.c.l.b16 %v248
        %v352 = vunpack.c.l.b16 %v249
        %v353 = vunpack.c.h.b16 %v249
        %v354 = vunpack.c.l.b16 %v250
        %v355 = vunpack.c.l.b16 %v251
        %v356 = vunpack.c.h.b16 %v251
        %v357 = vunpack.c.l.b16 %v252
        %v358 = vunpack.c.l.b16 %v253
        %v359 = vunpack.c.h.b16 %v253
        %v360 = vunpack.c.l.b16 %v254
        %v361 = vunpack.c.l.b16 %v255
        %v362 = vunpack.c.h.b16 %v255
        %v363 = vunpack.c.l.b16 %v256
        %v364 = vunpack.c.l.b16 %v257
        %v365 = vunpack.c.h.b16 %v257
        %v366 = vunpack.c.l.b16 %v258
        %v367 = vunpack.c.l.b16 %v259
        %v368 = vunpack.c.h.b16 %v259
        %v369 = vunpack.c.l.b16 %v260
        %v370 = vunpack.c.l.b16 %v261
        %v371 = vunpack.c.h.b16 %v261
        %v372 = vunpack.c.l.b16 %v262
        %v373 = vpack.c.b16 %v328, %v325
        %v374 = vpack.c.b16 %v329, %v326
        %v375 = vpack.c.b16 %v330, %v327
        %v376 = vpack.c.b16 %v334, %v331
        %v377 = vpack.c.b16 %v335, %v332
        %v378 = vpack.c.b16 %v336, %v333
        %v379 = vpack.c.b16 %v340, %v337
        %v380 = vpack.c.b16 %v341, %v338
        %v381 = vpack.c.b16 %v342, %v339
        %v382 = vpack.c.b16 %v346, %v343
        %v383 = vpack.c.b16 %v347, %v344
        %v384 = vpack.c.b16 %v348, %v345
        %v385 = vpack.c.b16 %v352, %v349
        %v386 = vpack.c.b16 %v353, %v350
        %v387 = vpack.c.b16 %v354, %v351
        %v388 = vpack.c.b16 %v358, %v355
        %v389 = vpack.c.b16 %v359, %v356
        %v390 = vpack.c.b16 %v360, %v357
        %v391 = vpack.c.b16 %v364, %v361
        %v392 = vpack.c.b16 %v365, %v362
        %v393 = vpack.c.b16 %v366, %v363
        %v394 = vpack.c.b16 %v370, %v367
        %v395 = vpack.c.b16 %v371, %v368
        %v396 = vpack.c.b16 %v372, %v369
        %421 = vmatprep.subr.bf16.mxu0 %v374
        %422 = vmatpush1.bf16.msra.mxu0 %v373
        %423 = vmatprep.subr.bf16.mxu0 %v377
        %424 = vmatpush1.bf16.msra.mxu0 %v376
        %425 = vmatprep.subr.bf16.mxu0 %v380
        %426 = vmatpush1.bf16.msra.mxu0 %v379
        %427 = vmatprep.subr.bf16.mxu0 %v383
        %428 = vmatpush1.bf16.msra.mxu0 %v382
        %429 = vmatprep.subr.bf16.mxu0 %v386
        %430 = vmatpush1.bf16.msra.mxu0 %v385
        %431 = vmatprep.subr.bf16.mxu0 %v389
        %432 = vmatpush1.bf16.msra.mxu0 %v388
        %433 = vmatprep.subr.bf16.mxu0 %v392
        %434 = vmatpush1.bf16.msra.mxu0 %v391
        %435 = vmatprep.subr.bf16.mxu0 %v395
        %436 = vmatpush1.bf16.msra.mxu0 %v394
        %437 = vmatprep.subr.bf16.mxu0 0
        %438 = vmatpush1.bf16.msra.mxu0 0
        %439 = vmatprep.subr.bf16.mxu0 0
        %440 = vmatpush1.bf16.msra.mxu0 0
        %441 = vmatprep.subr.bf16.mxu0 0
        %442 = vmatpush1.bf16.msra.mxu0 0
        %443 = vmatprep.subr.bf16.mxu0 0
        %444 = vmatpush1.bf16.msra.mxu0 0
        %445 = vmatprep.subr.bf16.mxu0 0
        %446 = vmatpush1.bf16.msra.mxu0 0
        %447 = vmatprep.subr.bf16.mxu0 0
        %448 = vmatpush1.bf16.msra.mxu0 0
        %449 = vmatprep.subr.bf16.mxu0 0
        %450 = vmatpush1.bf16.msra.mxu0 0
        %451 = vmatprep.subr.bf16.mxu0 0
        %452 = vmatpush1.bf16.msra.mxu0 0
        %453 = vmatprep.mubr.bf16.mxu0 0
        %454 = vmatmul.mubr.bf16.gmra.mrb[0].mxu0 %v223
        %v455 = vpop.f32.mrb[0].mxu0
        %v456 = vadd.f32 %v284, %v455
        %v457 = vpop.f32.mrb[0].mxu0
        %v458 = vadd.f32 %v288, %v457
        %v459 = vpop.f32.mrb[0].mxu0
        %v460 = vadd.f32 %v284, %v459
        %v461 = vpop.f32.mrb[0].mxu0
        %v462 = vadd.f32 %v288, %v461
        %463 = vmatprep.mubr.bf16.mxu0 0
        %464 = vmatmul.mubr.bf16.gmra.mrb[0].mxu0 %v224
        %v465 = vpop.f32.mrb[0].mxu0
        %v466 = vadd.f32 %v284, %v465
        %v467 = vpop.f32.mrb[0].mxu0
        %v468 = vadd.f32 %v288, %v467
        %v469 = vpop.f32.mrb[0].mxu0
        %v470 = vadd.f32 %v284, %v469
        %v471 = vpop.f32.mrb[0].mxu0
        %v472 = vadd.f32 %v288, %v471
        %473 = vmatprep.mubr.bf16.mxu0 0
        %474 = vmatmul.mubr.bf16.gmra.mrb[0].mxu0 %v225
        %v475 = vpop.f32.mrb[0].mxu0
        %v476 = vadd.f32 %v284, %v475
        %v477 = vpop.f32.mrb[0].mxu0
        %v478 = vadd.f32 %v288, %v477
        %v479 = vpop.f32.mrb[0].mxu0
        %v480 = vadd.f32 %v284, %v479
        %v481 = vpop.f32.mrb[0].mxu0
        %v482 = vadd.f32 %v288, %v481
        %483 = vmatprep.mubr.bf16.mxu0 0
        %484 = vmatmul.mubr.bf16.gmra.mrb[0].mxu0 %v226
        %v485 = vpop.f32.mrb[0].mxu0
        %v486 = vadd.f32 %v284, %v485
        %v487 = vpop.f32.mrb[0].mxu0
        %v488 = vadd.f32 %v288, %v487
        %v489 = vpop.f32.mrb[0].mxu0
        %v490 = vadd.f32 %v284, %v489
        %v491 = vpop.f32.mrb[0].mxu0
        %v492 = vadd.f32 %v288, %v491
        %493 = vmatprep.mubr.bf16.mxu0 0
        %494 = vmatmul.mubr.bf16.gmra.mrb[0].mxu0 %v227
        %v495 = vpop.f32.mrb[0].mxu0
        %v496 = vadd.f32 %v284, %v495
        %v497 = vpop.f32.mrb[0].mxu0
        %v498 = vadd.f32 %v288, %v497
        %v499 = vpop.f32.mrb[0].mxu0
        %v500 = vadd.f32 %v284, %v499
        %v501 = vpop.f32.mrb[0].mxu0
        %v502 = vadd.f32 %v288, %v501
        %503 = vmatprep.mubr.bf16.mxu0 0
        %504 = vmatmul.mubr.bf16.gmra.mrb[0].mxu0 %v228
        %v505 = vpop.f32.mrb[0].mxu0
        %v506 = vadd.f32 %v284, %v505
        %v507 = vpop.f32.mrb[0].mxu0
        %v508 = vadd.f32 %v288, %v507
        %v509 = vpop.f32.mrb[0].mxu0
        %v510 = vadd.f32 %v284, %v509
        %v511 = vpop.f32.mrb[0].mxu0
        %v512 = vadd.f32 %v288, %v511
        %513 = vmatprep.mubr.bf16.mxu0 0
        %514 = vmatmul.mubr.bf16.gmra.mrb[0].mxu0 %v229
        %v515 = vpop.f32.mrb[0].mxu0
        %v516 = vadd.f32 %v284, %v515
        %v517 = vpop.f32.mrb[0].mxu0
        %v518 = vadd.f32 %v288, %v517
        %v519 = vpop.f32.mrb[0].mxu0
        %v520 = vadd.f32 %v284, %v519
        %v521 = vpop.f32.mrb[0].mxu0
        %v522 = vadd.f32 %v288, %v521
        %523 = vmatprep.mubr.bf16.mxu0 0
        %524 = vmatmul.mubr.bf16.gmra.mrb[0].mxu0 %v230
        %v525 = vpop.f32.mrb[0].mxu0
        %v526 = vadd.f32 %v284, %v525
        %v527 = vpop.f32.mrb[0].mxu0
        %v528 = vadd.f32 %v288, %v527
        %v529 = vpop.f32.mrb[0].mxu0
        %v530 = vadd.f32 %v284, %v529
        %v531 = vpop.f32.mrb[0].mxu0
        %v532 = vadd.f32 %v288, %v531
        %533 = vdwg.mxu0
        %534 = vmatprep.subr.bf16.mxu0 0
        %535 = vmatpush1.bf16.msra.mxu0 %v375
        %536 = vmatprep.subr.bf16.mxu0 0
        %537 = vmatpush1.bf16.msra.mxu0 %v378
        %538 = vmatprep.subr.bf16.mxu0 0
        %539 = vmatpush1.bf16.msra.mxu0 %v381
        %540 = vmatprep.subr.bf16.mxu0 0
        %541 = vmatpush1.bf16.msra.mxu0 %v384
        %542 = vmatprep.subr.bf16.mxu0 0
        %543 = vmatpush1.bf16.msra.mxu0 %v387
        %544 = vmatprep.subr.bf16.mxu0 0
        %545 = vmatpush1.bf16.msra.mxu0 %v390
        %546 = vmatprep.subr.bf16.mxu0 0
        %547 = vmatpush1.bf16.msra.mxu0 %v393
        %548 = vmatprep.subr.bf16.mxu0 0
        %549 = vmatpush1.bf16.msra.mxu0 %v396
        %550 = vmatprep.subr.bf16.mxu0 0
        %551 = vmatpush1.bf16.msra.mxu0 0
        %552 = vmatprep.subr.bf16.mxu0 0
        %553 = vmatpush1.bf16.msra.mxu0 0
        %554 = vmatprep.subr.bf16.mxu0 0
        %555 = vmatpush1.bf16.msra.mxu0 0
        %556 = vmatprep.subr.bf16.mxu0 0
        %557 = vmatpush1.bf16.msra.mxu0 0
        %558 = vmatprep.subr.bf16.mxu0 0
        %559 = vmatpush1.bf16.msra.mxu0 0
        %560 = vmatprep.subr.bf16.mxu0 0
        %561 = vmatpush1.bf16.msra.mxu0 0
        %562 = vmatprep.subr.bf16.mxu0 0
        %563 = vmatpush1.bf16.msra.mxu0 0
        %564 = vmatprep.subr.bf16.mxu0 0
        %565 = vmatpush1.bf16.msra.mxu0 0
        %566 = vmatprep.mubr.bf16.mxu0 0
        %567 = vmatmul.mubr.bf16.gmra.mrb[0].mxu0 %v223
        %v568 = vpop.f32.mrb[0].mxu0
        %v569 = vadd.f32 %v292, %v568
        %v570 = vpop.f32.mrb[0].mxu0
        %v571 = vpop.f32.mrb[0].mxu0
        %v572 = vadd.f32 %v292, %v571
        %v573 = vpop.f32.mrb[0].mxu0
        %574 = vmatprep.mubr.bf16.mxu0 0
        %575 = vmatmul.mubr.bf16.gmra.mrb[0].mxu0 %v224
        %v576 = vpop.f32.mrb[0].mxu0
        %v577 = vadd.f32 %v292, %v576
        %v578 = vpop.f32.mrb[0].mxu0
        %v579 = vpop.f32.mrb[0].mxu0
        %v580 = vadd.f32 %v292, %v579
        %v581 = vpop.f32.mrb[0].mxu0
        %582 = vmatprep.mubr.bf16.mxu0 0
        %583 = vmatmul.mubr.bf16.gmra.mrb[0].mxu0 %v225
        %v584 = vpop.f32.mrb[0].mxu0
        %v585 = vadd.f32 %v292, %v584
        %v586 = vpop.f32.mrb[0].mxu0
        %v587 = vpop.f32.mrb[0].mxu0
        %v588 = vadd.f32 %v292, %v587
        %v589 = vpop.f32.mrb[0].mxu0
        %590 = vmatprep.mubr.bf16.mxu0 0
        %591 = vmatmul.mubr.bf16.gmra.mrb[0].mxu0 %v226
        %v592 = vpop.f32.mrb[0].mxu0
        %v593 = vadd.f32 %v292, %v592
        %v594 = vpop.f32.mrb[0].mxu0
        %v595 = vpop.f32.mrb[0].mxu0
        %v596 = vadd.f32 %v292, %v595
        %v597 = vpop.f32.mrb[0].mxu0
        %598 = vmatprep.mubr.bf16.mxu0 0
        %599 = vmatmul.mubr.bf16.gmra.mrb[0].mxu0 %v227
        %v600 = vpop.f32.mrb[0].mxu0
        %v601 = vadd.f32 %v292, %v600
        %v602 = vpop.f32.mrb[0].mxu0
        %v603 = vpop.f32.mrb[0].mxu0
        %v604 = vadd.f32 %v292, %v603
        %v605 = vpop.f32.mrb[0].mxu0
        %606 = vmatprep.mubr.bf16.mxu0 0
        %607 = vmatmul.mubr.bf16.gmra.mrb[0].mxu0 %v228
        %v608 = vpop.f32.mrb[0].mxu0
        %v609 = vadd.f32 %v292, %v608
        %v610 = vpop.f32.mrb[0].mxu0
        %v611 = vpop.f32.mrb[0].mxu0
        %v612 = vadd.f32 %v292, %v611
        %v613 = vpop.f32.mrb[0].mxu0
        %614 = vmatprep.mubr.bf16.mxu0 0
        %615 = vmatmul.mubr.bf16.gmra.mrb[0].mxu0 %v229
        %v616 = vpop.f32.mrb[0].mxu0
        %v617 = vadd.f32 %v292, %v616
        %v618 = vpop.f32.mrb[0].mxu0
        %v619 = vpop.f32.mrb[0].mxu0
        %v620 = vadd.f32 %v292, %v619
        %v621 = vpop.f32.mrb[0].mxu0
        %622 = vmatprep.mubr.bf16.mxu0 0
        %623 = vmatmul.mubr.bf16.gmra.mrb[0].mxu0 %v230
        %v624 = vpop.f32.mrb[0].mxu0
        %v625 = vadd.f32 %v292, %v624
        %v626 = vpop.f32.mrb[0].mxu0
        %v627 = vpop.f32.mrb[0].mxu0
        %v628 = vadd.f32 %v292, %v627
        %v629 = vpop.f32.mrb[0].mxu0
        %630 = vdwg.mxu0
        %v631 = vpack.c.bf16 %v460, %v456
        %v632 = vpack.c.bf16 %v462, %v458
        %v633 = vpack.c.bf16 %v572, %v569
        %v634 = vpack.c.bf16 %v470, %v466
        %v635 = vpack.c.bf16 %v472, %v468
        %v636 = vpack.c.bf16 %v580, %v577
        %v637 = vpack.c.bf16 %v480, %v476
        %v638 = vpack.c.bf16 %v482, %v478
        %v639 = vpack.c.bf16 %v588, %v585
        %v640 = vpack.c.bf16 %v490, %v486
        %v641 = vpack.c.bf16 %v492, %v488
        %v642 = vpack.c.bf16 %v596, %v593
        %v643 = vpack.c.bf16 %v500, %v496
        %v644 = vpack.c.bf16 %v502, %v498
        %v645 = vpack.c.bf16 %v604, %v601
        %v646 = vpack.c.bf16 %v510, %v506
        %v647 = vpack.c.bf16 %v512, %v508
        %v648 = vpack.c.bf16 %v612, %v609
        %v649 = vpack.c.bf16 %v520, %v516
        %v650 = vpack.c.bf16 %v522, %v518
        %v651 = vpack.c.bf16 %v620, %v617
        %v652 = vpack.c.bf16 %v530, %v526
        %v653 = vpack.c.bf16 %v532, %v528
        %v654 = vpack.c.bf16 %v628, %v625
        %v679 = vunpack.c.l.b16 %v631
        %v680 = vunpack.c.l.b16 %v632
        %v681 = vunpack.c.l.b16 %v633
        %v682 = vunpack.c.h.b16 %v631
        %v683 = vunpack.c.h.b16 %v632
        %v684 = vunpack.c.h.b16 %v633
        %v685 = vunpack.c.l.b16 %v634
        %v686 = vunpack.c.l.b16 %v635
        %v687 = vunpack.c.l.b16 %v636
        %v688 = vunpack.c.h.b16 %v634
        %v689 = vunpack.c.h.b16 %v635
        %v690 = vunpack.c.h.b16 %v636
        %v691 = vunpack.c.l.b16 %v637
        %v692 = vunpack.c.l.b16 %v638
        %v693 = vunpack.c.l.b16 %v639
        %v694 = vunpack.c.h.b16 %v637
        %v695 = vunpack.c.h.b16 %v638
        %v696 = vunpack.c.h.b16 %v639
        %v697 = vunpack.c.l.b16 %v640
        %v698 = vunpack.c.l.b16 %v641
        %v699 = vunpack.c.l.b16 %v642
        %v700 = vunpack.c.h.b16 %v640
        %v701 = vunpack.c.h.b16 %v641
        %v702 = vunpack.c.h.b16 %v642
        %v703 = vunpack.c.l.b16 %v643
        %v704 = vunpack.c.l.b16 %v644
        %v705 = vunpack.c.l.b16 %v645
        %v706 = vunpack.c.h.b16 %v643
        %v707 = vunpack.c.h.b16 %v644
        %v708 = vunpack.c.h.b16 %v645
        %v709 = vunpack.c.l.b16 %v646
        %v710 = vunpack.c.l.b16 %v647
        %v711 = vunpack.c.l.b16 %v648
        %v712 = vunpack.c.h.b16 %v646
        %v713 = vunpack.c.h.b16 %v647
        %v714 = vunpack.c.h.b16 %v648
        %v715 = vunpack.c.l.b16 %v649
        %v716 = vunpack.c.l.b16 %v650
        %v717 = vunpack.c.l.b16 %v651
        %v718 = vunpack.c.h.b16 %v649
        %v719 = vunpack.c.h.b16 %v650
        %v720 = vunpack.c.h.b16 %v651
        %v721 = vunpack.c.l.b16 %v652
        %v722 = vunpack.c.l.b16 %v653
        %v723 = vunpack.c.l.b16 %v654
        %v724 = vunpack.c.h.b16 %v652
        %v725 = vunpack.c.h.b16 %v653
        %v726 = vunpack.c.h.b16 %v654
        %v727 = vpack.c.b16 %v680, %v679
        %v728 = vpack.c.b16 %v681, %v681
        %v729 = vpack.c.b16 %v683, %v682
        %v730 = vpack.c.b16 %v684, %v684
        %v731 = vpack.c.b16 %v686, %v685
        %v732 = vpack.c.b16 %v687, %v687
        %v733 = vpack.c.b16 %v689, %v688
        %v734 = vpack.c.b16 %v690, %v690
        %v735 = vpack.c.b16 %v692, %v691
        %v736 = vpack.c.b16 %v693, %v693
        %v737 = vpack.c.b16 %v695, %v694
        %v738 = vpack.c.b16 %v696, %v696
        %v739 = vpack.c.b16 %v698, %v697
        %v740 = vpack.c.b16 %v699, %v699
        %v741 = vpack.c.b16 %v701, %v700
        %v742 = vpack.c.b16 %v702, %v702
        %v743 = vpack.c.b16 %v704, %v703
        %v744 = vpack.c.b16 %v705, %v705
        %v745 = vpack.c.b16 %v707, %v706
        %v746 = vpack.c.b16 %v708, %v708
        %v747 = vpack.c.b16 %v710, %v709
        %v748 = vpack.c.b16 %v711, %v711
        %v749 = vpack.c.b16 %v713, %v712
        %v750 = vpack.c.b16 %v714, %v714
        %v751 = vpack.c.b16 %v716, %v715
        %v752 = vpack.c.b16 %v717, %v717
        %v753 = vpack.c.b16 %v719, %v718
        %v754 = vpack.c.b16 %v720, %v720
        %v755 = vpack.c.b16 %v722, %v721
        %v756 = vpack.c.b16 %v723, %v723
        %v757 = vpack.c.b16 %v725, %v724
        %v758 = vpack.c.b16 %v726, %v726
        %791 = vst [vmem:[%s203] sm:$0xff] %v727
        %792 = vst [vmem:[%s203 + $0x8] sm:$0xf] %v728
        %793 = vst [vmem:[%s203 + $0xc] sm:$0xff] %v729
        %794 = vst [vmem:[%s203 + $0x14] sm:$0xf] %v730
        %795 = vst [vmem:[%s203 + $0x18] sm:$0xff] %v731
        %796 = vst [vmem:[%s203 + $0x20] sm:$0xf] %v732
        %797 = vst [vmem:[%s203 + $0x24] sm:$0xff] %v733
        %798 = vst [vmem:[%s203 + $0x2c] sm:$0xf] %v734
        %799 = vst [vmem:[%s203 + $0x30] sm:$0xff] %v735
        %800 = vst [vmem:[%s203 + $0x38] sm:$0xf] %v736
        %801 = vst [vmem:[%s203 + $0x3c] sm:$0xff] %v737
        %802 = vst [vmem:[%s203 + $0x44] sm:$0xf] %v738
        %803 = vst [vmem:[%s203 + $0x48] sm:$0xff] %v739
        %804 = vst [vmem:[%s203 + $0x50] sm:$0xf] %v740
        %805 = vst [vmem:[%s203 + $0x54] sm:$0xff] %v741
        %806 = vst [vmem:[%s203 + $0x5c] sm:$0xf] %v742
        %807 = vst [vmem:[%s203 + $0x60] sm:$0xff] %v743
        %808 = vst [vmem:[%s203 + $0x68] sm:$0xf] %v744
        %809 = vst [vmem:[%s203 + $0x6c] sm:$0xff] %v745
        %810 = vst [vmem:[%s203 + $0x74] sm:$0xf] %v746
        %811 = vst [vmem:[%s203 + $0x78] sm:$0xff] %v747
        %812 = vst [vmem:[%s203 + $0x80] sm:$0xf] %v748
        %813 = vst [vmem:[%s203 + $0x84] sm:$0xff] %v749
        %814 = vst [vmem:[%s203 + $0x8c] sm:$0xf] %v750
        %815 = vst [vmem:[%s203 + $0x90] sm:$0xff] %v751
        %816 = vst [vmem:[%s203 + $0x98] sm:$0xf] %v752
        %817 = vst [vmem:[%s203 + $0x9c] sm:$0xff] %v753
        %818 = vst [vmem:[%s203 + $0xa4] sm:$0xf] %v754
        %819 = vst [vmem:[%s203 + $0xa8] sm:$0xff] %v755
        %820 = vst [vmem:[%s203 + $0xb0] sm:$0xf] %v756
        %821 = vst [vmem:[%s203 + $0xb4] sm:$0xff] %v757
        %822 = vst [vmem:[%s203 + $0xbc] sm:$0xf] %v758
        %s823 = sand.u32 %s97, 1
        %s824 = scalar_lea.sflag [#allocation4], %s823
        %s825 = sand.u32 %s97, 1
        %s826 = smul.addr %s825, 192
        %s827 = scalar_lea.vmem [#allocation7], %s826
        // Predicated region
        $region41: #{tpu_custom_call.1} parent=31 // pred_check
          %p828 = pneg %p107
        $region42: #{tpu_custom_call.1} parent=31 // pred_check_branch
          %830 = sbr.rel (%p828) target = $region44
        $region43: #{tpu_custom_call.1} parent=31 // pred_region
          %s831 = smul.u32 16, %s21
          %s833 = ssub.s32 3072, 3072
          %834 = vsyncadd %s824, %s833
          %s835 = smul.addr %s831, 3
          %s836 = smul.addr %s835, 64
          %s837 = scalar_lea.hbm %s3, %s836
          %s838 = sshll.u32 %s827, 4
          %s839 = int_to_ptr.vmem [resolvable:$true] %s838
          %844 = dma.vmem_to_hbm [thread:$0]  %s839, 3072, %s837, %s824, 192, 192, 12
        $region44: #{tpu_custom_call.1} parent=31 // pred_fallthru
          _
      $region32: #{tpu_custom_call.1} parent=5 // pred_fallthru
        _
      %p845 = scmp.le.s32.totalorder 2, %s16
      // Predicated region
      $region45: #{tpu_custom_call.1} parent=5 // pred_check
        %p846 = pneg %p845
      $region46: #{tpu_custom_call.1} parent=5 // pred_check_branch
        %848 = sbr.rel (%p846) target = $region48
      $region47: #{tpu_custom_call.1} parent=5 // pred_region
        %s849 = ssub.s32 %s16, 2
        // Predicated region
        $region49: #{tpu_custom_call.1} parent=47 // pred_check
          %p850 = pneg %p113
        $region50: #{tpu_custom_call.1} parent=47 // pred_check_branch
          %852 = sbr.rel (%p850) target = $region52
        $region51: #{tpu_custom_call.1} parent=47 // pred_region
          %s853 = sand.u32 %s98, 1
          %s854 = scalar_lea.sflag [#allocation4], %s853
          %s855 = sand.u32 %s98, 1
          %s856 = smul.addr %s855, 192
          %s857 = scalar_lea.vmem [#allocation7], %s856
          %858 = dma.done %s854, 3072
        $region52: #{tpu_custom_call.1} parent=47 // pred_fallthru
          _
      $region48: #{tpu_custom_call.1} parent=5 // pred_fallthru
        _
    $region6: #{tpu_custom_call.1} parent=1 // loop_footer
      %s20 = sadd.s32 1, %s16
    $region7: #{tpu_custom_call.1} parent=1 // loop_footer_branch
      %15 = sbr.rel target = $region3
    $region8: #{tpu_custom_call.1} parent=1 // loop_exit
      _
    %859 = vsyncpa [#allocation3], 1
    %s860 = scalar_lea.sflag [#allocation3], 1
    %861 = vsyncpa %s860, 1
    %862 = vsyncpa [#allocation6], 1
    %863 = vsyncpa [#allocation4], 1
    %s864 = scalar_lea.sflag [#allocation4], 1
    %865 = vsyncpa %s864, 1

</llo_original>
